<compile_context>
chip_gen: v5e
topology: v5e:2x2
jax: 0.10.0
libtpu: 0.0.40
codegen_flags: <defaults>
</compile_context>

<pallas_src>
import functools

import jax
import jax.numpy as jnp
from jax.experimental import pallas as pl
from jax.experimental.pallas import tpu as pltpu


def _round_up(n, m):
    return ((n + m - 1) // m) * m


def _mgem_kernel(
    x_ref,       # [TB, Din]
    w1_ref,      # [Din, 64]
    b1_ref,      # [1, 64]
    w2_ref,      # [64, 32]
    b2_ref,      # [1, 32]
    w3_ref,      # [1, 32] if Dout == 1 else [32, Dout]
    b3_ref,      # [1, Dout]
    ct_ref,      # [Dout, n_spheres]   (centers, transposed)
    scale_ref,   # [1, n_spheres]      (-0.5 / r^2, radius already clamped)
    infl_ref,    # [1, n_spheres]
    out_ref,     # out: [TB, Dout + 1]  ([pred | energy] slab)
    *,
    dout: int,
):
    x = x_ref[...]

    # ---- predictor MLP (MXU for the two wide layers, VPU ReLUs) ----
    h1 = jnp.dot(x, w1_ref[...], preferred_element_type=jnp.float32) + b1_ref[...]
    h1 = jnp.maximum(h1, 0.0)
    # Dropout(0.1) -> identity in inference mode.
    h2 = jnp.dot(h1, w2_ref[...], preferred_element_type=jnp.float32) + b2_ref[...]
    h2 = jnp.maximum(h2, 0.0)

    if dout == 1:
        # K=32 -> N=1 "matmul": a full MXU pass would waste 127+/128 output
        # lanes, so do it as a broadcast-multiply + row reduction on VPU/XLU.
        pred = jnp.sum(h2 * w3_ref[...], axis=-1, keepdims=True) + b3_ref[...]
    else:
        pred = jnp.dot(h2, w3_ref[...], preferred_element_type=jnp.float32) + b3_ref[...]

    # ---- multi-sphere energy landscape (vectorized over spheres) ----
    ct = ct_ref[...]                                   # [Dout, n_spheres]
    if dout == 1:
        d2 = (pred - ct) ** 2                          # [TB, n_spheres]
    else:
        p2 = jnp.sum(pred * pred, axis=-1, keepdims=True)      # [TB, 1]
        c2 = jnp.sum(ct * ct, axis=0, keepdims=True)           # [1, n_spheres]
        d2 = p2 - 2.0 * jnp.dot(pred, ct, preferred_element_type=jnp.float32) + c2

    total = jnp.sum(infl_ref[...] * jnp.exp(d2 * scale_ref[...]),
                    axis=-1, keepdims=True)            # [TB, 1]
    energy = -jnp.log(total + 1e-8)

    # Packed output slab: [pred | energy].
    out_ref[:, 0:dout] = pred.astype(out_ref.dtype)
    out_ref[:, dout:dout + 1] = energy.astype(out_ref.dtype)


def mgem_forward(x, params, *, n_spheres, block_b=1024):
    """Returns (predictions [B, Dout], energy [B])."""
    B, Din = x.shape
    Dout = params["b3"].shape[-1]

    # --- parameter transforms (glue, matches the PyTorch `radius` property) ---
    radii = jnp.clip(jnp.exp(params["log_radius"]), 0.1, 5.0)        # [n_spheres]
    scale = (-0.5 / (radii * radii)).reshape(1, n_spheres).astype(jnp.float32)
    infl = params["influences"].reshape(1, n_spheres).astype(jnp.float32)
    centers_t = params["centers"].T                                   # [Dout, n_spheres]
    w3 = params["w3"].T if Dout == 1 else params["w3"]                # [1,32] or [32,Dout]

    # --- batch tiling: pad B to a multiple of the tile (ragged tail safe) ---
    tb = min(block_b, _round_up(B, 8))
    padded_b = _round_up(B, tb)
    if padded_b != B:
        x = jnp.pad(x, ((0, padded_b - B), (0, 0)))
    grid = (padded_b // tb,)

    def const_spec(arr):
        nd = arr.ndim
        return pl.BlockSpec(arr.shape, lambda i, nd=nd: (0,) * nd)

    kernel = functools.partial(_mgem_kernel, dout=Dout)

    flops = 2 * padded_b * (Din * 64 + 64 * 32 + 32 * Dout + Dout * n_spheres)
    transcendentals = padded_b * (n_spheres + 1)                      # exp per sphere + log
    bytes_accessed = 4 * (
        padded_b * (Din + Dout + 1)
        + Din * 64 + 64 + 64 * 32 + 32 + 32 * Dout + Dout
        + n_spheres * (Dout + 2)
    )

    out = pl.pallas_call(
        kernel,
        out_shape=jax.ShapeDtypeStruct((padded_b, Dout + 1), jnp.float32),
        grid=grid,
        in_specs=[
            pl.BlockSpec((tb, Din), lambda i: (i, 0)),   # x: streamed per tile
            const_spec(params["w1"]), const_spec(params["b1"]),
            const_spec(params["w2"]), const_spec(params["b2"]),
            const_spec(w3), const_spec(params["b3"]),
            const_spec(centers_t), const_spec(scale), const_spec(infl),
        ],
        out_specs=pl.BlockSpec((tb, Dout + 1), lambda i: (i, 0)),
        compiler_params=pltpu.CompilerParams(
            dimension_semantics=("parallel",),           # megacore-shardable on v7x
            vmem_limit_bytes=32 * 1024 * 1024,           # safe on v5e/v6e/v7x scoped VMEM
        ),
        cost_estimate=pl.CostEstimate(
            flops=flops,
            transcendentals=transcendentals,
            bytes_accessed=bytes_accessed,
        ),
    )(
        x,
        params["w1"], params["b1"],
        params["w2"], params["b2"],
        w3, params["b3"],
        centers_t, scale, infl,
    )

    pred = out[:B, :Dout]
    energy = out[:B, Dout]
    return pred, energy


def init_params(key, input_dim, output_dim=1, n_spheres=3):
    ks = jax.random.split(key, 4)

    def linear(kw, fan_in, fan_out):
        # Kaiming-uniform-ish deterministic init (PyTorch Linear default style).
        bound = 1.0 / jnp.sqrt(fan_in)
        kw1, kw2 = jax.random.split(kw)
        w = jax.random.uniform(kw1, (fan_in, fan_out), jnp.float32, -bound, bound)
        b = jax.random.uniform(kw2, (1, fan_out), jnp.float32, -bound, bound)
        return w, b

    w1, b1 = linear(ks[0], input_dim, 64)
    w2, b2 = linear(ks[1], 64, 32)
    w3, b3 = linear(ks[2], 32, output_dim)

    centers = jax.random.normal(ks[3], (n_spheres, output_dim), jnp.float32) * 0.5
    init_radii = jnp.array([1.0 + 0.2 * i for i in range(n_spheres)], jnp.float32)
    log_radius = jnp.log(init_radii)                                   # [n_spheres]
    influences = jnp.ones((n_spheres,), jnp.float32)

    # TODO(synk): energy_weight parameter exists in the module but is unused in forward().
    return {
        "w1": w1, "b1": b1,
        "w2": w2, "b2": b2,
        "w3": w3, "b3": b3,
        "centers": centers, "log_radius": log_radius, "influences": influences,
    }


def reference_forward(x, params, n_spheres):
    h1 = jnp.maximum(x @ params["w1"] + params["b1"], 0.0)
    h2 = jnp.maximum(h1 @ params["w2"] + params["b2"], 0.0)
    pred = h2 @ params["w3"] + params["b3"]
    radii = jnp.clip(jnp.exp(params["log_radius"]), 0.1, 5.0)
    total = jnp.zeros((x.shape[0],), jnp.float32)
    for i in range(n_spheres):
        dist = jnp.linalg.norm(pred - params["centers"][i], axis=-1)
        total = total + params["influences"][i] * jnp.exp(-0.5 * (dist / radii[i]) ** 2)
    return pred, -jnp.log(total + 1e-8)


if __name__ == "__main__":
    INPUT_DIM, OUTPUT_DIM, N_SPHERES = 32, 1, 3

    key = jax.random.PRNGKey(0)
    kx, kp, kx2 = jax.random.split(key, 3)
    params = init_params(kp, INPUT_DIM, OUTPUT_DIM, N_SPHERES)

    # Test 1: ragged batch (B not a multiple of the tile) with a multi-step grid.
    B1 = 20
    x1 = jax.random.normal(kx, (B1, INPUT_DIM), jnp.float32)
    pred1, energy1 = mgem_forward(x1, params, n_spheres=N_SPHERES, block_b=8)
    jax.block_until_ready((pred1, energy1))
    pred1_ref, energy1_ref = reference_forward(x1, params, N_SPHERES)
    assert pred1.shape == (B1, OUTPUT_DIM) and energy1.shape == (B1,)
    assert jnp.allclose(pred1, pred1_ref, atol=1e-5, rtol=1e-5)
    assert jnp.allclose(energy1, energy1_ref, atol=1e-5, rtol=1e-5)

    # Test 2: larger batch to exercise the pipelined batch grid (tile=128).
    B2 = 300
    x2 = jax.random.normal(kx2, (B2, INPUT_DIM), jnp.float32)
    pred2, energy2 = mgem_forward(x2, params, n_spheres=N_SPHERES, block_b=128)
    jax.block_until_ready((pred2, energy2))
    pred2_ref, energy2_ref = reference_forward(x2, params, N_SPHERES)
    assert pred2.shape == (B2, OUTPUT_DIM) and energy2.shape == (B2,)
    assert jnp.allclose(pred2, pred2_ref, atol=1e-5, rtol=1e-5)
    assert jnp.allclose(energy2, energy2_ref, atol=1e-5, rtol=1e-5)

    print("KERNEL_OK")
</pallas_src>

<mosaic_0001>
module attributes {stable_mosaic.version = 11 : i64} {
  func.func @_mgem_kernel(%arg0: i32, %arg1: memref<8x32xf32, #tpu.memory_space<vmem>>, %arg2: memref<32x64xf32, #tpu.memory_space<vmem>>, %arg3: memref<1x64xf32, #tpu.memory_space<vmem>>, %arg4: memref<64x32xf32, #tpu.memory_space<vmem>>, %arg5: memref<1x32xf32, #tpu.memory_space<vmem>>, %arg6: memref<1x32xf32, #tpu.memory_space<vmem>>, %arg7: memref<1x1xf32, #tpu.memory_space<vmem>>, %arg8: memref<1x3xf32, #tpu.memory_space<vmem>>, %arg9: memref<1x3xf32, #tpu.memory_space<vmem>>, %arg10: memref<1x3xf32, #tpu.memory_space<vmem>>, %arg11: memref<8x2xf32, #tpu.memory_space<vmem>>) attributes {dimension_semantics = [#tpu.dimension_semantics<parallel>], iteration_bounds = array<i64: 3>, scalar_prefetch = 0 : i64, scratch_operands = 0 : i64, tpu.core_type = #tpu.core_type<tc>, window_params = [{transform_indices = @transform_0, window_bounds = array<i64: 8, 32>}, {pipeline_mode = #tpu.pipeline_mode<synchronous>, transform_indices = @transform_1, window_bounds = array<i64: 32, 64>}, {pipeline_mode = #tpu.pipeline_mode<synchronous>, transform_indices = @transform_2, window_bounds = array<i64: 1, 64>}, {pipeline_mode = #tpu.pipeline_mode<synchronous>, transform_indices = @transform_3, window_bounds = array<i64: 64, 32>}, {pipeline_mode = #tpu.pipeline_mode<synchronous>, transform_indices = @transform_4, window_bounds = array<i64: 1, 32>}, {pipeline_mode = #tpu.pipeline_mode<synchronous>, transform_indices = @transform_5, window_bounds = array<i64: 1, 32>}, {pipeline_mode = #tpu.pipeline_mode<synchronous>, transform_indices = @transform_6, window_bounds = array<i64: 1, 1>}, {pipeline_mode = #tpu.pipeline_mode<synchronous>, transform_indices = @transform_7, window_bounds = array<i64: 1, 3>}, {pipeline_mode = #tpu.pipeline_mode<synchronous>, transform_indices = @transform_8, window_bounds = array<i64: 1, 3>}, {pipeline_mode = #tpu.pipeline_mode<synchronous>, transform_indices = @transform_9, window_bounds = array<i64: 1, 3>}, {transform_indices = @transform_10, window_bounds = array<i64: 8, 2>}]} {
    %c0 = arith.constant 0 : index
    %c0_0 = arith.constant 0 : index
    %0 = vector.load %arg1[%c0, %c0_0] : memref<8x32xf32, #tpu.memory_space<vmem>>, vector<8x32xf32>
    %c0_1 = arith.constant 0 : index
    %c0_2 = arith.constant 0 : index
    %1 = vector.load %arg2[%c0_1, %c0_2] : memref<32x64xf32, #tpu.memory_space<vmem>>, vector<32x64xf32>
    %cst = arith.constant dense<0.000000e+00> : vector<8x64xf32>
    %2 = tpu.matmul %0, %1, %cst {dimension_numbers = #tpu.dot_dimension_numbers<[1], [0], [0], [1], [0, 0, 1, 1], [], []>} : vector<8x32xf32>, vector<32x64xf32>, vector<8x64xf32> -> vector<8x64xf32>
    %c0_3 = arith.constant 0 : index
    %c0_4 = arith.constant 0 : index
    %3 = vector.load %arg3[%c0_3, %c0_4] : memref<1x64xf32, #tpu.memory_space<vmem>>, vector<1x64xf32>
    %4 = vector.broadcast %3 : vector<1x64xf32> to vector<8x64xf32>
    %5 = arith.addf %2, %4 : vector<8x64xf32>
    %cst_5 = arith.constant 0.000000e+00 : f32
    %6 = vector.broadcast %cst_5 : f32 to vector<8x64xf32>
    %7 = arith.maximumf %5, %6 : vector<8x64xf32>
    %c0_6 = arith.constant 0 : index
    %c0_7 = arith.constant 0 : index
    %8 = vector.load %arg4[%c0_6, %c0_7] : memref<64x32xf32, #tpu.memory_space<vmem>>, vector<64x32xf32>
    %cst_8 = arith.constant dense<0.000000e+00> : vector<8x32xf32>
    %9 = tpu.matmul %7, %8, %cst_8 {dimension_numbers = #tpu.dot_dimension_numbers<[1], [0], [0], [1], [0, 0, 1, 1], [], []>} : vector<8x64xf32>, vector<64x32xf32>, vector<8x32xf32> -> vector<8x32xf32>
    %c0_9 = arith.constant 0 : index
    %c0_10 = arith.constant 0 : index
    %10 = vector.load %arg5[%c0_9, %c0_10] : memref<1x32xf32, #tpu.memory_space<vmem>>, vector<1x32xf32>
    %11 = vector.broadcast %10 : vector<1x32xf32> to vector<8x32xf32>
    %12 = arith.addf %9, %11 : vector<8x32xf32>
    %cst_11 = arith.constant 0.000000e+00 : f32
    %13 = vector.broadcast %cst_11 : f32 to vector<8x32xf32>
    %14 = arith.maximumf %12, %13 : vector<8x32xf32>
    %c0_12 = arith.constant 0 : index
    %c0_13 = arith.constant 0 : index
    %15 = vector.load %arg6[%c0_12, %c0_13] : memref<1x32xf32, #tpu.memory_space<vmem>>, vector<1x32xf32>
    %16 = vector.broadcast %15 : vector<1x32xf32> to vector<8x32xf32>
    %17 = arith.mulf %14, %16 : vector<8x32xf32>
    %cst_14 = arith.constant dense<0.000000e+00> : vector<8xf32>
    %18 = vector.multi_reduction <add>, %17, %cst_14 [1] : vector<8x32xf32> to vector<8xf32>
    %19 = vector.shape_cast %18 : vector<8xf32> to vector<8x1xf32>
    %c0_15 = arith.constant 0 : index
    %c0_16 = arith.constant 0 : index
    %20 = vector.load %arg7[%c0_15, %c0_16] : memref<1x1xf32, #tpu.memory_space<vmem>>, vector<1x1xf32>
    %21 = vector.broadcast %20 : vector<1x1xf32> to vector<8x1xf32>
    %22 = arith.addf %19, %21 : vector<8x1xf32>
    %c0_17 = arith.constant 0 : index
    %c0_18 = arith.constant 0 : index
    %23 = vector.load %arg8[%c0_17, %c0_18] : memref<1x3xf32, #tpu.memory_space<vmem>>, vector<1x3xf32>
    %24 = vector.broadcast %22 : vector<8x1xf32> to vector<8x3xf32>
    %25 = vector.broadcast %23 : vector<1x3xf32> to vector<8x3xf32>
    %26 = arith.subf %24, %25 : vector<8x3xf32>
    %27 = arith.mulf %26, %26 : vector<8x3xf32>
    %c0_19 = arith.constant 0 : index
    %c0_20 = arith.constant 0 : index
    %28 = vector.load %arg10[%c0_19, %c0_20] : memref<1x3xf32, #tpu.memory_space<vmem>>, vector<1x3xf32>
    %c0_21 = arith.constant 0 : index
    %c0_22 = arith.constant 0 : index
    %29 = vector.load %arg9[%c0_21, %c0_22] : memref<1x3xf32, #tpu.memory_space<vmem>>, vector<1x3xf32>
    %30 = vector.broadcast %29 : vector<1x3xf32> to vector<8x3xf32>
    %31 = arith.mulf %27, %30 : vector<8x3xf32>
    %32 = math.exp %31 : vector<8x3xf32>
    %33 = vector.broadcast %28 : vector<1x3xf32> to vector<8x3xf32>
    %34 = arith.mulf %33, %32 : vector<8x3xf32>
    %cst_23 = arith.constant dense<0.000000e+00> : vector<8xf32>
    %35 = vector.multi_reduction <add>, %34, %cst_23 [1] : vector<8x3xf32> to vector<8xf32>
    %36 = vector.shape_cast %35 : vector<8xf32> to vector<8x1xf32>
    %cst_24 = arith.constant 9.99999993E-9 : f32
    %37 = vector.broadcast %cst_24 : f32 to vector<8x1xf32>
    %38 = arith.addf %36, %37 : vector<8x1xf32>
    %39 = math.log %38 : vector<8x1xf32>
    %cst_25 = arith.constant 0.000000e+00 : f32
    %40 = vector.broadcast %cst_25 : f32 to vector<8x1xf32>
    %41 = arith.subf %40, %39 : vector<8x1xf32>
    %c0_26 = arith.constant 0 : index
    %c0_27 = arith.constant 0 : index
    %42 = vector.load %arg11[%c0_26, %c0_27] : memref<8x2xf32, #tpu.memory_space<vmem>>, vector<8x1xf32>
    tpu.vector_store %arg11[%c0_26, %c0_27], %22 {strides = array<i32>} : memref<8x2xf32, #tpu.memory_space<vmem>>, vector<8x1xf32>,
    %c0_28 = arith.constant 0 : index
    %c1 = arith.constant 1 : index
    %43 = vector.load %arg11[%c0_28, %c1] : memref<8x2xf32, #tpu.memory_space<vmem>>, vector<8x1xf32>
    tpu.vector_store %arg11[%c0_28, %c1], %41 {strides = array<i32>} : memref<8x2xf32, #tpu.memory_space<vmem>>, vector<8x1xf32>,
    return
  }
  func.func @transform_0(%arg0: i32) -> (i32, i32) {
    %c0_i32 = arith.constant 0 : i32
    %c0_i32_0 = arith.constant 0 : i32
    return %arg0, %c0_i32 : i32, i32
  }
  func.func @transform_1(%arg0: i32) -> (i32, i32) {
    %c0_i32 = arith.constant 0 : i32
    %c0_i32_0 = arith.constant 0 : i32
    %c0_i32_1 = arith.constant 0 : i32
    return %c0_i32, %c0_i32_0 : i32, i32
  }
  func.func @transform_2(%arg0: i32) -> (i32, i32) {
    %c0_i32 = arith.constant 0 : i32
    %c0_i32_0 = arith.constant 0 : i32
    %c0_i32_1 = arith.constant 0 : i32
    return %c0_i32, %c0_i32_0 : i32, i32
  }
  func.func @transform_3(%arg0: i32) -> (i32, i32) {
    %c0_i32 = arith.constant 0 : i32
    %c0_i32_0 = arith.constant 0 : i32
    %c0_i32_1 = arith.constant 0 : i32
    return %c0_i32, %c0_i32_0 : i32, i32
  }
  func.func @transform_4(%arg0: i32) -> (i32, i32) {
    %c0_i32 = arith.constant 0 : i32
    %c0_i32_0 = arith.constant 0 : i32
    %c0_i32_1 = arith.constant 0 : i32
    return %c0_i32, %c0_i32_0 : i32, i32
  }
  func.func @transform_5(%arg0: i32) -> (i32, i32) {
    %c0_i32 = arith.constant 0 : i32
    %c0_i32_0 = arith.constant 0 : i32
    %c0_i32_1 = arith.constant 0 : i32
    return %c0_i32, %c0_i32_0 : i32, i32
  }
  func.func @transform_6(%arg0: i32) -> (i32, i32) {
    %c0_i32 = arith.constant 0 : i32
    %c0_i32_0 = arith.constant 0 : i32
    %c0_i32_1 = arith.constant 0 : i32
    return %c0_i32, %c0_i32_0 : i32, i32
  }
  func.func @transform_7(%arg0: i32) -> (i32, i32) {
    %c0_i32 = arith.constant 0 : i32
    %c0_i32_0 = arith.constant 0 : i32
    %c0_i32_1 = arith.constant 0 : i32
    return %c0_i32, %c0_i32_0 : i32, i32
  }
  func.func @transform_8(%arg0: i32) -> (i32, i32) {
    %c0_i32 = arith.constant 0 : i32
    %c0_i32_0 = arith.constant 0 : i32
    %c0_i32_1 = arith.constant 0 : i32
    return %c0_i32, %c0_i32_0 : i32, i32
  }
  func.func @transform_9(%arg0: i32) -> (i32, i32) {
    %c0_i32 = arith.constant 0 : i32
    %c0_i32_0 = arith.constant 0 : i32
    %c0_i32_1 = arith.constant 0 : i32
    return %c0_i32, %c0_i32_0 : i32, i32
  }
  func.func @transform_10(%arg0: i32) -> (i32, i32) {
    %c0_i32 = arith.constant 0 : i32
    %c0_i32_0 = arith.constant 0 : i32
    return %arg0, %c0_i32 : i32, i32
  }
}

</mosaic_0001>

<llo_original>
// kernel: tpu_custom_call.1
$region0: #{tpu_custom_call.1}
  #allocation0 [shape = 'u32[]', space=smem, size = 0x4, offset = 0x4, fixed_abs, tag = 'smem constant byte address 0x4 - core index']
  #allocation1 [shape = 'u32[72,128]{1,0:T(1,128)}', space=vmem, size = 0x9000, scoped, tag = 'internal scratch']
  #allocation2 [shape = 'f32[1,1]{1,0:T(1,128)S(1)}', space=vmem, size = 0x200, scoped, tag = 'scoped memory for tpu_custom_call.1']
  %s0 = inlined_call_operand.vmem [shape: f32[24,32], index: 0, kind: input, shape index: {}]
  %s1 = inlined_call_operand.vmem [shape: f32[32,64], index: 1, kind: input, shape index: {}]
  %s2 = inlined_call_operand.vmem [shape: f32[1,64], index: 2, kind: input, shape index: {}]
  %s3 = inlined_call_operand.vmem [shape: f32[64,32], index: 3, kind: input, shape index: {}]
  %s4 = inlined_call_operand.vmem [shape: f32[1,32], index: 4, kind: input, shape index: {}]
  %s5 = inlined_call_operand.vmem [shape: f32[1,32], index: 5, kind: input, shape index: {}]
  %s6 = inlined_call_operand.<no memory space> [shape: f32[1,1], index: 6, kind: input, shape index: {}]
  %s7 = inlined_call_operand.vmem [shape: f32[1,3], index: 7, kind: input, shape index: {}]
  %s8 = inlined_call_operand.vmem [shape: f32[1,3], index: 8, kind: input, shape index: {}]
  %s9 = inlined_call_operand.vmem [shape: f32[1,3], index: 9, kind: input, shape index: {}]
  %s10 = inlined_call_operand.vmem [shape: f32[24,2], index: 10, kind: output, shape index: {}]
  %s11 = sld [smem:[#allocation0]]
  $region73: #{tpu_custom_call.1} parent=0
    _
  %s13 = ssub.s32 1, %s11
  %s14 = scalar_select 0, %s13, %s11
  %v15 = vstv %s6
  %16 = vst [vmem:[#allocation2] sm:$0x1] %v15
  loop: start=0, step=1, limit=5
  $region2: #{tpu_custom_call.1} parent=0 // loop_pre_header
    _
  $region3: #{tpu_custom_call.1} parent=0 // loop_header
    %s18 = sphi 0, %s22
    %p19 = scmp.ge.s32.totalorder %s18, 5
    %s28 = sphi 0, %s30
    %s31 = sphi 0, %s28
    %s32 = sphi 0, %s31
    %s48 = sphi 0, %s32
    %s52 = sphi 0, %s52
    %s54 = sphi 0, %s52
    %s55 = sphi 0, %s54
    %s69 = sphi 0, %s55
    %s73 = sphi 0, %s73
    %s75 = sphi 0, %s73
    %s76 = sphi 0, %s75
    %s90 = sphi 0, %s76
    %s94 = sphi 0, %s94
    %s96 = sphi 0, %s94
    %s97 = sphi 0, %s96
    %s111 = sphi 0, %s97
    %s115 = sphi 0, %s115
    %s117 = sphi 0, %s115
    %s118 = sphi 0, %s117
    %s132 = sphi 0, %s118
    %s136 = sphi 0, %s136
    %s138 = sphi 0, %s136
    %s139 = sphi 0, %s138
    %s153 = sphi 0, %s139
    %s157 = sphi 0, %s157
    %s159 = sphi 0, %s157
    %s160 = sphi 0, %s159
    %s174 = sphi 0, %s160
    %s178 = sphi 0, %s178
    %s180 = sphi 0, %s178
    %s181 = sphi 0, %s180
    %s195 = sphi 0, %s181
    %s199 = sphi 0, %s199
    %s201 = sphi 0, %s199
    %s202 = sphi 0, %s201
    %s216 = sphi 0, %s202
    %s220 = sphi 0, %s220
    %s222 = sphi 0, %s220
    %s223 = sphi 0, %s222
    %s237 = sphi 0, %s223
    %s243 = sphi 0, %s245
    %s246 = sphi 0, %s243
    %s247 = sphi 0, %s246
    %s263 = sphi 0, %s247
  $region4: #{tpu_custom_call.1} parent=0 // loop_header_branch
    %21 = sbr.rel (%p19) target = $region8
  $region5: #{tpu_custom_call.1} parent=0 // loop_body
    %s23 = ssub.s32 %s18, 1
    %s24 = ssub.s32 %s18, 2
    %s25 = sadd.s32 %s18, 1
    %s26 = ssub.s32 %s18, %s25
    %p27 = scmp.eq.s32.totalorder %s26, 0
    %s29 = sadd.s32 %s28, 1
    %s30 = scalar_select %p27, %s28, %s29
    %p33 = pneg %p27
    %p34 = scmp.eq.s32.totalorder %s18, 2
    %p35 = por %p33, %p34
    %p36 = scmp.ne.s32.totalorder %s28, %s31
    %p37 = scmp.eq.s32.totalorder %s18, 0
    %p38 = por %p36, %p37
    %p39 = scmp.ne.s32.totalorder %s28, %s31
    %p40 = scmp.eq.s32.totalorder %s23, 2
    %p41 = por %p39, %p40
    %p42 = scmp.ne.s32.totalorder %s31, %s32
    %p43 = scmp.eq.s32.totalorder %s23, 0
    %p44 = por %p42, %p43
    %p45 = scmp.ne.s32.totalorder %s31, %s32
    %p46 = scmp.eq.s32.totalorder %s24, 2
    %p47 = por %p45, %p46
    %p49 = scmp.ne.s32.totalorder %s32, %s48
    %p50 = scmp.eq.s32.totalorder %s24, 0
    %p51 = por %p49, %p50
    %s53 = sadd.s32 %s52, 1
    %p56 = scmp.eq.s32.totalorder %s18, 2
    %p57 = scmp.ne.s32.totalorder %s52, %s54
    %p58 = scmp.eq.s32.totalorder %s18, 0
    %p59 = por %p57, %p58
    %p60 = scmp.ne.s32.totalorder %s52, %s54
    %p61 = scmp.eq.s32.totalorder %s23, 2
    %p62 = por %p60, %p61
    %p63 = scmp.ne.s32.totalorder %s54, %s55
    %p64 = scmp.eq.s32.totalorder %s23, 0
    %p65 = por %p63, %p64
    %p66 = scmp.ne.s32.totalorder %s54, %s55
    %p67 = scmp.eq.s32.totalorder %s24, 2
    %p68 = por %p66, %p67
    %p70 = scmp.ne.s32.totalorder %s55, %s69
    %p71 = scmp.eq.s32.totalorder %s24, 0
    %p72 = por %p70, %p71
    %s74 = sadd.s32 %s73, 1
    %p77 = scmp.eq.s32.totalorder %s18, 2
    %p78 = scmp.ne.s32.totalorder %s73, %s75
    %p79 = scmp.eq.s32.totalorder %s18, 0
    %p80 = por %p78, %p79
    %p81 = scmp.ne.s32.totalorder %s73, %s75
    %p82 = scmp.eq.s32.totalorder %s23, 2
    %p83 = por %p81, %p82
    %p84 = scmp.ne.s32.totalorder %s75, %s76
    %p85 = scmp.eq.s32.totalorder %s23, 0
    %p86 = por %p84, %p85
    %p87 = scmp.ne.s32.totalorder %s75, %s76
    %p88 = scmp.eq.s32.totalorder %s24, 2
    %p89 = por %p87, %p88
    %p91 = scmp.ne.s32.totalorder %s76, %s90
    %p92 = scmp.eq.s32.totalorder %s24, 0
    %p93 = por %p91, %p92
    %s95 = sadd.s32 %s94, 1
    %p98 = scmp.eq.s32.totalorder %s18, 2
    %p99 = scmp.ne.s32.totalorder %s94, %s96
    %p100 = scmp.eq.s32.totalorder %s18, 0
    %p101 = por %p99, %p100
    %p102 = scmp.ne.s32.totalorder %s94, %s96
    %p103 = scmp.eq.s32.totalorder %s23, 2
    %p104 = por %p102, %p103
    %p105 = scmp.ne.s32.totalorder %s96, %s97
    %p106 = scmp.eq.s32.totalorder %s23, 0
    %p107 = por %p105, %p106
    %p108 = scmp.ne.s32.totalorder %s96, %s97
    %p109 = scmp.eq.s32.totalorder %s24, 2
    %p110 = por %p108, %p109
    %p112 = scmp.ne.s32.totalorder %s97, %s111
    %p113 = scmp.eq.s32.totalorder %s24, 0
    %p114 = por %p112, %p113
    %s116 = sadd.s32 %s115, 1
    %p119 = scmp.eq.s32.totalorder %s18, 2
    %p120 = scmp.ne.s32.totalorder %s115, %s117
    %p121 = scmp.eq.s32.totalorder %s18, 0
    %p122 = por %p120, %p121
    %p123 = scmp.ne.s32.totalorder %s115, %s117
    %p124 = scmp.eq.s32.totalorder %s23, 2
    %p125 = por %p123, %p124
    %p126 = scmp.ne.s32.totalorder %s117, %s118
    %p127 = scmp.eq.s32.totalorder %s23, 0
    %p128 = por %p126, %p127
    %p129 = scmp.ne.s32.totalorder %s117, %s118
    %p130 = scmp.eq.s32.totalorder %s24, 2
    %p131 = por %p129, %p130
    %p133 = scmp.ne.s32.totalorder %s118, %s132
    %p134 = scmp.eq.s32.totalorder %s24, 0
    %p135 = por %p133, %p134
    %s137 = sadd.s32 %s136, 1
    %p140 = scmp.eq.s32.totalorder %s18, 2
    %p141 = scmp.ne.s32.totalorder %s136, %s138
    %p142 = scmp.eq.s32.totalorder %s18, 0
    %p143 = por %p141, %p142
    %p144 = scmp.ne.s32.totalorder %s136, %s138
    %p145 = scmp.eq.s32.totalorder %s23, 2
    %p146 = por %p144, %p145
    %p147 = scmp.ne.s32.totalorder %s138, %s139
    %p148 = scmp.eq.s32.totalorder %s23, 0
    %p149 = por %p147, %p148
    %p150 = scmp.ne.s32.totalorder %s138, %s139
    %p151 = scmp.eq.s32.totalorder %s24, 2
    %p152 = por %p150, %p151
    %p154 = scmp.ne.s32.totalorder %s139, %s153
    %p155 = scmp.eq.s32.totalorder %s24, 0
    %p156 = por %p154, %p155
    %s158 = sadd.s32 %s157, 1
    %p161 = scmp.eq.s32.totalorder %s18, 2
    %p162 = scmp.ne.s32.totalorder %s157, %s159
    %p163 = scmp.eq.s32.totalorder %s18, 0
    %p164 = por %p162, %p163
    %p165 = scmp.ne.s32.totalorder %s157, %s159
    %p166 = scmp.eq.s32.totalorder %s23, 2
    %p167 = por %p165, %p166
    %p168 = scmp.ne.s32.totalorder %s159, %s160
    %p169 = scmp.eq.s32.totalorder %s23, 0
    %p170 = por %p168, %p169
    %p171 = scmp.ne.s32.totalorder %s159, %s160
    %p172 = scmp.eq.s32.totalorder %s24, 2
    %p173 = por %p171, %p172
    %p175 = scmp.ne.s32.totalorder %s160, %s174
    %p176 = scmp.eq.s32.totalorder %s24, 0
    %p177 = por %p175, %p176
    %s179 = sadd.s32 %s178, 1
    %p182 = scmp.eq.s32.totalorder %s18, 2
    %p183 = scmp.ne.s32.totalorder %s178, %s180
    %p184 = scmp.eq.s32.totalorder %s18, 0
    %p185 = por %p183, %p184
    %p186 = scmp.ne.s32.totalorder %s178, %s180
    %p187 = scmp.eq.s32.totalorder %s23, 2
    %p188 = por %p186, %p187
    %p189 = scmp.ne.s32.totalorder %s180, %s181
    %p190 = scmp.eq.s32.totalorder %s23, 0
    %p191 = por %p189, %p190
    %p192 = scmp.ne.s32.totalorder %s180, %s181
    %p193 = scmp.eq.s32.totalorder %s24, 2
    %p194 = por %p192, %p193
    %p196 = scmp.ne.s32.totalorder %s181, %s195
    %p197 = scmp.eq.s32.totalorder %s24, 0
    %p198 = por %p196, %p197
    %s200 = sadd.s32 %s199, 1
    %p203 = scmp.eq.s32.totalorder %s18, 2
    %p204 = scmp.ne.s32.totalorder %s199, %s201
    %p205 = scmp.eq.s32.totalorder %s18, 0
    %p206 = por %p204, %p205
    %p207 = scmp.ne.s32.totalorder %s199, %s201
    %p208 = scmp.eq.s32.totalorder %s23, 2
    %p209 = por %p207, %p208
    %p210 = scmp.ne.s32.totalorder %s201, %s202
    %p211 = scmp.eq.s32.totalorder %s23, 0
    %p212 = por %p210, %p211
    %p213 = scmp.ne.s32.totalorder %s201, %s202
    %p214 = scmp.eq.s32.totalorder %s24, 2
    %p215 = por %p213, %p214
    %p217 = scmp.ne.s32.totalorder %s202, %s216
    %p218 = scmp.eq.s32.totalorder %s24, 0
    %p219 = por %p217, %p218
    %s221 = sadd.s32 %s220, 1
    %p224 = scmp.eq.s32.totalorder %s18, 2
    %p225 = scmp.ne.s32.totalorder %s220, %s222
    %p226 = scmp.eq.s32.totalorder %s18, 0
    %p227 = por %p225, %p226
    %p228 = scmp.ne.s32.totalorder %s220, %s222
    %p229 = scmp.eq.s32.totalorder %s23, 2
    %p230 = por %p228, %p229
    %p231 = scmp.ne.s32.totalorder %s222, %s223
    %p232 = scmp.eq.s32.totalorder %s23, 0
    %p233 = por %p231, %p232
    %p234 = scmp.ne.s32.totalorder %s222, %s223
    %p235 = scmp.eq.s32.totalorder %s24, 2
    %p236 = por %p234, %p235
    %p238 = scmp.ne.s32.totalorder %s223, %s237
    %p239 = scmp.eq.s32.totalorder %s24, 0
    %p240 = por %p238, %p239
    %s241 = ssub.s32 %s18, %s25
    %p242 = scmp.eq.s32.totalorder %s241, 0
    %s244 = sadd.s32 %s243, 1
    %s245 = scalar_select %p242, %s243, %s244
    %p248 = pneg %p242
    %p249 = scmp.eq.s32.totalorder %s18, 2
    %p250 = por %p248, %p249
    %p251 = scmp.ne.s32.totalorder %s243, %s246
    %p252 = scmp.eq.s32.totalorder %s18, 0
    %p253 = por %p251, %p252
    %p254 = scmp.ne.s32.totalorder %s243, %s246
    %p255 = scmp.eq.s32.totalorder %s23, 2
    %p256 = por %p254, %p255
    %p257 = scmp.ne.s32.totalorder %s246, %s247
    %p258 = scmp.eq.s32.totalorder %s23, 0
    %p259 = por %p257, %p258
    %p260 = scmp.ne.s32.totalorder %s246, %s247
    %p261 = scmp.eq.s32.totalorder %s24, 2
    %p262 = por %p260, %p261
    %p264 = scmp.ne.s32.totalorder %s247, %s263
    %p265 = scmp.eq.s32.totalorder %s24, 0
    %p266 = por %p264, %p265
    %p267 = scmp.le.s32.totalorder 1, %s18
    %p268 = scmp.lt.s32.totalorder %s18, 4
    %p269 = pnand %p267, %p268
    %p270 = pneg %p269
    // Predicated region
    $region9: #{tpu_custom_call.1} parent=5 // pred_check
      _
    $region10: #{tpu_custom_call.1} parent=5 // pred_check_branch
      %272 = sbr.rel (%p269) target = $region12
    $region11: #{tpu_custom_call.1} parent=5 // pred_region
      %s273 = ssub.s32 %s18, 1
      // Predicated region
      $region13: #{tpu_custom_call.1} parent=11 // pred_check
        %p274 = pneg %p65
      $region14: #{tpu_custom_call.1} parent=11 // pred_check_branch
        %276 = sbr.rel (%p274) target = $region16
      $region15: #{tpu_custom_call.1} parent=11 // pred_region
        _
      $region16: #{tpu_custom_call.1} parent=11 // pred_fallthru
        _
      // Predicated region
      $region17: #{tpu_custom_call.1} parent=11 // pred_check
        %p277 = pneg %p86
      $region18: #{tpu_custom_call.1} parent=11 // pred_check_branch
        %279 = sbr.rel (%p277) target = $region20
      $region19: #{tpu_custom_call.1} parent=11 // pred_region
        _
      $region20: #{tpu_custom_call.1} parent=11 // pred_fallthru
        _
      // Predicated region
      $region21: #{tpu_custom_call.1} parent=11 // pred_check
        %p280 = pneg %p107
      $region22: #{tpu_custom_call.1} parent=11 // pred_check_branch
        %282 = sbr.rel (%p280) target = $region24
      $region23: #{tpu_custom_call.1} parent=11 // pred_region
        _
      $region24: #{tpu_custom_call.1} parent=11 // pred_fallthru
        _
      // Predicated region
      $region25: #{tpu_custom_call.1} parent=11 // pred_check
        %p283 = pneg %p128
      $region26: #{tpu_custom_call.1} parent=11 // pred_check_branch
        %285 = sbr.rel (%p283) target = $region28
      $region27: #{tpu_custom_call.1} parent=11 // pred_region
        _
      $region28: #{tpu_custom_call.1} parent=11 // pred_fallthru
        _
      // Predicated region
      $region29: #{tpu_custom_call.1} parent=11 // pred_check
        %p286 = pneg %p149
      $region30: #{tpu_custom_call.1} parent=11 // pred_check_branch
        %288 = sbr.rel (%p286) target = $region32
      $region31: #{tpu_custom_call.1} parent=11 // pred_region
        _
      $region32: #{tpu_custom_call.1} parent=11 // pred_fallthru
        _
      // Predicated region
      $region33: #{tpu_custom_call.1} parent=11 // pred_check
        %p289 = pneg %p170
      $region34: #{tpu_custom_call.1} parent=11 // pred_check_branch
        %291 = sbr.rel (%p289) target = $region36
      $region35: #{tpu_custom_call.1} parent=11 // pred_region
        _
      $region36: #{tpu_custom_call.1} parent=11 // pred_fallthru
        _
      // Predicated region
      $region37: #{tpu_custom_call.1} parent=11 // pred_check
        %p292 = pneg %p191
      $region38: #{tpu_custom_call.1} parent=11 // pred_check_branch
        %294 = sbr.rel (%p292) target = $region40
      $region39: #{tpu_custom_call.1} parent=11 // pred_region
        _
      $region40: #{tpu_custom_call.1} parent=11 // pred_fallthru
        _
      // Predicated region
      $region41: #{tpu_custom_call.1} parent=11 // pred_check
        %p295 = pneg %p212
      $region42: #{tpu_custom_call.1} parent=11 // pred_check_branch
        %297 = sbr.rel (%p295) target = $region44
      $region43: #{tpu_custom_call.1} parent=11 // pred_region
        _
      $region44: #{tpu_custom_call.1} parent=11 // pred_fallthru
        _
      // Predicated region
      $region45: #{tpu_custom_call.1} parent=11 // pred_check
        %p298 = pneg %p233
      $region46: #{tpu_custom_call.1} parent=11 // pred_check_branch
        %300 = sbr.rel (%p298) target = $region48
      $region47: #{tpu_custom_call.1} parent=11 // pred_region
        _
      $region48: #{tpu_custom_call.1} parent=11 // pred_fallthru
        _
    $region12: #{tpu_custom_call.1} parent=5 // pred_fallthru
      _
    %p301 = scmp.lt.s32.totalorder %s18, 3
    // Predicated region
    $region49: #{tpu_custom_call.1} parent=5 // pred_check
      %p302 = pneg %p301
    $region50: #{tpu_custom_call.1} parent=5 // pred_check_branch
      %304 = sbr.rel (%p302) target = $region52
    $region51: #{tpu_custom_call.1} parent=5 // pred_region
      // Predicated region
      $region53: #{tpu_custom_call.1} parent=51 // pred_check
        %p305 = pneg %p38
      $region54: #{tpu_custom_call.1} parent=51 // pred_check_branch
        %307 = sbr.rel (%p305) target = $region56
      $region55: #{tpu_custom_call.1} parent=51 // pred_region
        %p308 = scmp.lt.s32.totalorder %s18, 2
        %s309 = scalar_select %p308, %s18, 2
        %s310 = smul.addr %s309, 8
        %s311 = scalar_lea.vmem %s0, %s310
      $region56: #{tpu_custom_call.1} parent=51 // pred_fallthru
        _
    $region52: #{tpu_custom_call.1} parent=5 // pred_fallthru
      _
    %p312 = scmp.le.s32.totalorder 1, %s18
    %p313 = scmp.lt.s32.totalorder %s18, 4
    %p314 = pnand %p312, %p313
    %p315 = pneg %p314
    // Predicated region
    $region57: #{tpu_custom_call.1} parent=5 // pred_check
      _
    $region58: #{tpu_custom_call.1} parent=5 // pred_check_branch
      %317 = sbr.rel (%p314) target = $region60
    $region59: #{tpu_custom_call.1} parent=5 // pred_region
      %s318 = ssub.s32 %s18, 1
      %p319 = scmp.lt.s32.totalorder %s23, 2
      %s320 = scalar_select %p319, %s23, 2
      %s321 = smul.addr %s320, 8
      %s322 = scalar_lea.vmem %s0, %s321
      %p323 = pneg %p44
      %p324 = pneg %p41
      %p325 = pneg %p65
      %p326 = pneg %p62
      %p327 = pneg %p86
      %p328 = pneg %p83
      %p329 = pneg %p107
      %p330 = pneg %p104
      %p331 = pneg %p128
      %p332 = pneg %p125
      %p333 = pneg %p149
      %p334 = pneg %p146
      %p335 = pneg %p170
      %p336 = pneg %p167
      %p337 = pneg %p191
      %p338 = pneg %p188
      %p339 = pneg %p212
      %p340 = pneg %p209
      %p341 = pneg %p233
      %p342 = pneg %p230
      %p343 = pneg %p259
      %p344 = pneg %p256
      %p345 = scmp.lt.s32.totalorder %s23, 2
      %s346 = scalar_select %p345, %s23, 2
      %s347 = smul.addr %s346, 8
      %s348 = scalar_lea.vmem %s10, %s347
      %p349 = scmp.lt.s32.totalorder %s23, 2
      %s350 = scalar_select %p349, %s23, 2
      %s351 = smul.addr %s350, 8
      %s352 = scalar_lea.vmem %s0, %s351
      %p353 = scmp.lt.s32.totalorder %s23, 2
      %s354 = scalar_select %p353, %s23, 2
      %s355 = smul.addr %s354, 8
      %s356 = scalar_lea.vmem %s10, %s355
      %v357 = vld [vmem:[%s352] sm:$0xff]
      %v358 = vld [vmem:[%s1] sm:$0xff]
      %v359 = vld [vmem:[%s1 + $0x8] sm:$0xff]
      %v360 = vld [vmem:[%s1 + $0x10] sm:$0xff]
      %v361 = vld [vmem:[%s1 + $0x18] sm:$0xff]
      %v362 = vld [vmem:[%s2] sm:$0x1]
      %v364 = vperm.slane %v362, 0
      %vm366 = vcmask 261120
      %v368 = vsel %vm366, %v357, 0
      %370 = vmatpush.msra.mxu0 0.0
      %371 = vmatpush.msra.mxu0 0.0
      %372 = vmatpush.msra.mxu0 0.0
      %373 = vmatpush.msra.mxu0 0.0
      %374 = vmatpush.msra.mxu0 0.0
      %375 = vmatpush.msra.mxu0 0.0
      %376 = vmatpush.msra.mxu0 0.0
      %377 = vmatpush.msra.mxu0 0.0
      %378 = vmatpush.msra.mxu0 0.0
      %379 = vmatpush.msra.mxu0 0.0
      %380 = vmatpush.msra.mxu0 0.0
      %381 = vmatpush.msra.mxu0 0.0
      %382 = vmatpush.msra.mxu0 %v361
      %383 = vmatpush.msra.mxu0 %v360
      %384 = vmatpush.msra.mxu0 %v359
      %385 = vmatpush.msra.mxu0 %v358
      %386 = vmatmul.f32.gmra.mxu0 %v368
      %v387 = vpop.f32.mrf.mxu0
      %v388 = vadd.f32 %v364, %v387
      %389 = vdwg.mxu0
      %v390 = vmax.f32 %v388, 0.0
      %v391 = vld [vmem:[%s3] sm:$0xff]
      %v392 = vld [vmem:[%s3 + $0x8] sm:$0xff]
      %v393 = vld [vmem:[%s3 + $0x10] sm:$0xff]
      %v394 = vld [vmem:[%s3 + $0x18] sm:$0xff]
      %v395 = vld [vmem:[%s3 + $0x20] sm:$0xff]
      %v396 = vld [vmem:[%s3 + $0x28] sm:$0xff]
      %v397 = vld [vmem:[%s3 + $0x30] sm:$0xff]
      %v398 = vld [vmem:[%s3 + $0x38] sm:$0xff]
      %v399 = vld [vmem:[%s4] sm:$0x1]
      %v401 = vperm.slane %v399, 0
      %vm403 = vcmask 523264
      %v405 = vsel %vm403, %v390, 0
      %407 = vmatpush.msra.mxu0 0.0
      %408 = vmatpush.msra.mxu0 0.0
      %409 = vmatpush.msra.mxu0 0.0
      %410 = vmatpush.msra.mxu0 0.0
      %411 = vmatpush.msra.mxu0 0.0
      %412 = vmatpush.msra.mxu0 0.0
      %413 = vmatpush.msra.mxu0 0.0
      %414 = vmatpush.msra.mxu0 0.0
      %415 = vmatpush.msra.mxu0 %v398
      %416 = vmatpush.msra.mxu0 %v397
      %417 = vmatpush.msra.mxu0 %v396
      %418 = vmatpush.msra.mxu0 %v395
      %419 = vmatpush.msra.mxu0 %v394
      %420 = vmatpush.msra.mxu0 %v393
      %421 = vmatpush.msra.mxu0 %v392
      %422 = vmatpush.msra.mxu0 %v391
      %423 = vmatmul.f32.gmra.mxu0 %v405
      %v424 = vpop.f32.mrf.mxu0
      %v425 = vadd.f32 %v401, %v424
      %426 = vdwg.mxu0
      %v427 = vmax.f32 %v425, 0.0
      %v428 = vld [vmem:[%s5] sm:$0x1]
      %v430 = vperm.slane %v428, 0
      %v432 = vmul.f32 %v427, %v430
      %v433 = vsel %vm366, %v432, 0.0
      %434 = vadd.xlane.f32.xlu0 %v433
      %v435 = vpop.xlane.xlu0 %434
      %v436 = vld [vmem:[#allocation2] sm:$0x1]
      %v438 = vperm.slane %v436, 0
      %v440 = vadd.f32 %v435, %v438
      %v441 = vld [vmem:[%s7] sm:$0x1]
      %443 = vset.pattern.permute.xlu0 0
      %444 = vperm.xlu0 %443, %v440
      %v445 = vpop.permute.xlu0 %444
      %v448 = vperm.slane %v441, 0
      %v450 = vsub.f32 %v445, %v448
      %v451 = vmul.f32 %v450, %v450
      %v452 = vld [vmem:[%s9] sm:$0x1]
      %v453 = vld [vmem:[%s8] sm:$0x1]
      %v455 = vperm.slane %v453, 0
      %v457 = vmul.f32 %v451, %v455
      %v458 = vmul.f32 %v457, 1.442695
      %v459 = vpow.pop %v458
      %v461 = vperm.slane %v452, 0
      %v463 = vmul.f32 %v461, %v459
      %vm464 = vcmask 23552
      %v465 = vsel %vm464, %v463, 0.0
      %466 = vadd.xlane.f32.xlu0 %v465
      %v467 = vpop.xlane.xlu0 %466
      %v468 = vadd.f32 %v467, 1e-08
      %v469 = vlog2.pop %v468
      %v470 = vmul.f32 %v469, 0.6931472
      %v471 = vsub.f32 0.0, %v470
      %vm472 = vcmask 7168
      %473 = vst.msk [vmem:[%s356] sm:$0xff] %vm472, %v440
      %vm474 = vcmask 15368
      %475 = vst.msk [vmem:[%s356] sm:$0xff] %vm474, %v471
      %p476 = scmp.lt.s32.totalorder %s23, 2
      %s477 = scalar_select %p476, %s23, 2
      %s478 = smul.addr %s477, 8
      %s479 = scalar_lea.vmem %s10, %s478
      // Predicated region
      $region61: #{tpu_custom_call.1} parent=59 // pred_check
        %p480 = pneg %p256
      $region62: #{tpu_custom_call.1} parent=59 // pred_check_branch
        %482 = sbr.rel (%p480) target = $region64
      $region63: #{tpu_custom_call.1} parent=59 // pred_region
        _
      $region64: #{tpu_custom_call.1} parent=59 // pred_fallthru
        _
    $region60: #{tpu_custom_call.1} parent=5 // pred_fallthru
      _
    %p483 = scmp.le.s32.totalorder 2, %s18
    // Predicated region
    $region65: #{tpu_custom_call.1} parent=5 // pred_check
      %p484 = pneg %p483
    $region66: #{tpu_custom_call.1} parent=5 // pred_check_branch
      %486 = sbr.rel (%p484) target = $region68
    $region67: #{tpu_custom_call.1} parent=5 // pred_region
      %s487 = ssub.s32 %s18, 2
      // Predicated region
      $region69: #{tpu_custom_call.1} parent=67 // pred_check
        %p488 = pneg %p262
      $region70: #{tpu_custom_call.1} parent=67 // pred_check_branch
        %490 = sbr.rel (%p488) target = $region72
      $region71: #{tpu_custom_call.1} parent=67 // pred_region
        %p491 = scmp.lt.s32.totalorder %s24, 2
        %s492 = scalar_select %p491, %s24, 2
        %s493 = smul.addr %s492, 8
        %s494 = scalar_lea.vmem %s10, %s493
      $region72: #{tpu_custom_call.1} parent=67 // pred_fallthru
        _
    $region68: #{tpu_custom_call.1} parent=5 // pred_fallthru
      _
  $region6: #{tpu_custom_call.1} parent=0 // loop_footer
    %s22 = sadd.s32 1, %s18
  $region7: #{tpu_custom_call.1} parent=0 // loop_footer_branch
    %17 = sbr.rel target = $region3
  $region8: #{tpu_custom_call.1} parent=0 // loop_exit
    _

</llo_original>
